<compile_context>
chip_gen: v7x
topology: tpu7x:2x2x1
jax: 0.10.0
libtpu: 0.0.40
codegen_flags: <defaults>
</compile_context>

<pallas_src>
import functools

import jax
import jax.numpy as jnp
from jax.experimental import pallas as pl
from jax.experimental.pallas import tpu as pltpu

LANE = 128   # TPU lane width (batch tile granularity)
IN_PAD = 8   # feature dim padded to one full sublane group


def qnet_kernel(xT_ref, w1T_ref, b1_ref, w2T_ref, b2_ref, oT_ref):
    # bf16 storage -> f32 compute (portable F32 x F32 = F32 contractions).
    xT = xT_ref[...].astype(jnp.float32)     # (IN_PAD, TB)
    w1T = w1T_ref[...].astype(jnp.float32)   # (H, IN_PAD)
    w2T = w2T_ref[...].astype(jnp.float32)   # (O, H)

    # fc1: h^T = W1^T (H, K) @ x^T (K, TB) -> (H, TB), bias + ReLU in f32.
    h = jnp.dot(w1T, xT, preferred_element_type=jnp.float32)
    h = jnp.maximum(h + b1_ref[...], 0.0)

    # fc2: out^T = W2^T (O, H) @ h^T (H, TB) -> (O, TB), lane-dense store.
    out = jnp.dot(w2T, h, preferred_element_type=jnp.float32)
    oT_ref[...] = (out + b2_ref[...]).astype(oT_ref.dtype)


@functools.partial(jax.jit, static_argnames=("tb",))
def qnetwork_forward(x, w1, b1, w2, b2, *, tb=512):
    """x: (B, in) f32; w1: (in, H); b1: (H,); w2: (H, O); b2: (O,).
    Returns (B, O) f32 == fc2(relu(fc1(x)))."""
    B, in_size = x.shape
    hidden = w1.shape[1]
    out_size = w2.shape[1]

    # Batch tile: multiple of 128; shrink for small B so we don't over-pad.
    tb_eff = min(tb, pl.cdiv(B, LANE) * LANE)
    b_pad = pl.cdiv(B, tb_eff) * tb_eff
    grid = (b_pad // tb_eff,)

    # Transposed, zero-padded, bf16-stored operands (lane-dense batch axis).
    xT = jnp.zeros((IN_PAD, b_pad), jnp.bfloat16)
    xT = xT.at[:in_size, :B].set(x.T.astype(jnp.bfloat16))
    w1T = jnp.zeros((hidden, IN_PAD), jnp.bfloat16)
    w1T = w1T.at[:, :in_size].set(w1.T.astype(jnp.bfloat16))
    w2T = w2.T.astype(jnp.bfloat16)                       # (O, H)
    b1c = b1.reshape(hidden, 1).astype(jnp.float32)
    b2c = b2.reshape(out_size, 1).astype(jnp.float32)

    outT = pl.pallas_call(
        qnet_kernel,
        out_shape=jax.ShapeDtypeStruct((out_size, b_pad), jnp.float32),
        grid=grid,
        in_specs=[
            pl.BlockSpec((IN_PAD, tb_eff), lambda i: (0, i)),    # x^T tile
            pl.BlockSpec((hidden, IN_PAD), lambda i: (0, 0)),    # W1^T (resident)
            pl.BlockSpec((hidden, 1), lambda i: (0, 0)),         # b1   (resident)
            pl.BlockSpec((out_size, hidden), lambda i: (0, 0)),  # W2^T (resident)
            pl.BlockSpec((out_size, 1), lambda i: (0, 0)),       # b2   (resident)
        ],
        out_specs=pl.BlockSpec((out_size, tb_eff), lambda i: (0, i)),
        compiler_params=pltpu.CompilerParams(
            dimension_semantics=("parallel",)),
    )(xT, w1T, b1c, w2T, b2c)

    # Layout plumbing back to the PyTorch-style (B, O) view.
    return outT[:, :B].T


def init_params(key, input_size, hidden_size, output_size):
    """Deterministic init mimicking nn.Linear default (uniform ±1/sqrt(fan_in))."""
    k1, k2, k3, k4 = jax.random.split(key, 4)
    bound1 = 1.0 / jnp.sqrt(input_size)
    bound2 = 1.0 / jnp.sqrt(hidden_size)
    w1 = jax.random.uniform(k1, (input_size, hidden_size), jnp.float32, -bound1, bound1)
    b1 = jax.random.uniform(k2, (hidden_size,), jnp.float32, -bound1, bound1)
    w2 = jax.random.uniform(k3, (hidden_size, output_size), jnp.float32, -bound2, bound2)
    b2 = jax.random.uniform(k4, (output_size,), jnp.float32, -bound2, bound2)
    return w1, b1, w2, b2


def ref_forward(x, w1, b1, w2, b2):
    h = jnp.maximum(
        jnp.dot(x, w1, precision=jax.lax.Precision.HIGHEST) + b1, 0.0)
    return jnp.dot(h, w2, precision=jax.lax.Precision.HIGHEST) + b2


if __name__ == "__main__":
    # CartPole-v1: observation dim = 4, actions = 2, hidden = 128.
    input_size, hidden_size, output_size = 4, 128, 2

    key = jax.random.PRNGKey(0)
    kx1, kx2, kp = jax.random.split(key, 3)
    w1, b1, w2, b2 = init_params(kp, input_size, hidden_size, output_size)

    # Small RL-style batch (single tile) and a non-divisible batch with a
    # forced small tile to exercise the multi-step grid + padding path.
    for kx, batch, tb in ((kx1, 8, 512), (kx2, 300, 128)):
        x = jax.random.normal(kx, (batch, input_size), jnp.float32)
        out = jax.block_until_ready(qnetwork_forward(x, w1, b1, w2, b2, tb=tb))
        ref = ref_forward(x, w1, b1, w2, b2)
        assert out.shape == (batch, output_size)
        # bf16-stored inputs -> slightly looser tolerance vs the f32 reference.
        assert jnp.allclose(out, ref, atol=5e-2, rtol=5e-2), (
            float(jnp.max(jnp.abs(out - ref))))

    print("KERNEL_OK")
</pallas_src>

<mosaic_0001>
module attributes {stable_mosaic.version = 11 : i64} {
  func.func @qnet_kernel(%arg0: i32, %arg1: memref<8x128xbf16, #tpu.memory_space<vmem>>, %arg2: memref<128x8xbf16, #tpu.memory_space<vmem>>, %arg3: memref<128x1xf32, #tpu.memory_space<vmem>>, %arg4: memref<2x128xbf16, #tpu.memory_space<vmem>>, %arg5: memref<2x1xf32, #tpu.memory_space<vmem>>, %arg6: memref<2x128xf32, #tpu.memory_space<vmem>>) attributes {dimension_semantics = [#tpu.dimension_semantics<parallel>], iteration_bounds = array<i64: 1>, scalar_prefetch = 0 : i64, scratch_operands = 0 : i64, tpu.core_type = #tpu.core_type<tc>, window_params = [{transform_indices = @transform_0, window_bounds = array<i64: 8, 128>}, {pipeline_mode = #tpu.pipeline_mode<synchronous>, transform_indices = @transform_1, window_bounds = array<i64: 128, 8>}, {pipeline_mode = #tpu.pipeline_mode<synchronous>, transform_indices = @transform_2, window_bounds = array<i64: 128, 1>}, {pipeline_mode = #tpu.pipeline_mode<synchronous>, transform_indices = @transform_3, window_bounds = array<i64: 2, 128>}, {pipeline_mode = #tpu.pipeline_mode<synchronous>, transform_indices = @transform_4, window_bounds = array<i64: 2, 1>}, {transform_indices = @transform_5, window_bounds = array<i64: 2, 128>}]} {
    %c0 = arith.constant 0 : index
    %c0_0 = arith.constant 0 : index
    %0 = vector.load %arg1[%c0, %c0_0] : memref<8x128xbf16, #tpu.memory_space<vmem>>, vector<8x128xbf16>
    %1 = arith.extf %0 : vector<8x128xbf16> to vector<8x128xf32>
    %c0_1 = arith.constant 0 : index
    %c0_2 = arith.constant 0 : index
    %2 = vector.load %arg2[%c0_1, %c0_2] : memref<128x8xbf16, #tpu.memory_space<vmem>>, vector<128x8xbf16>
    %3 = arith.extf %2 : vector<128x8xbf16> to vector<128x8xf32>
    %c0_3 = arith.constant 0 : index
    %c0_4 = arith.constant 0 : index
    %4 = vector.load %arg4[%c0_3, %c0_4] : memref<2x128xbf16, #tpu.memory_space<vmem>>, vector<2x128xbf16>
    %5 = arith.extf %4 : vector<2x128xbf16> to vector<2x128xf32>
    %cst = arith.constant dense<0.000000e+00> : vector<128x128xf32>
    %6 = tpu.matmul %3, %1, %cst {dimension_numbers = #tpu.dot_dimension_numbers<[1], [0], [0], [1], [0, 0, 1, 1], [], []>} : vector<128x8xf32>, vector<8x128xf32>, vector<128x128xf32> -> vector<128x128xf32>
    %c0_5 = arith.constant 0 : index
    %c0_6 = arith.constant 0 : index
    %7 = vector.load %arg3[%c0_5, %c0_6] : memref<128x1xf32, #tpu.memory_space<vmem>>, vector<128x1xf32>
    %8 = vector.broadcast %7 : vector<128x1xf32> to vector<128x128xf32>
    %9 = arith.addf %6, %8 : vector<128x128xf32>
    %cst_7 = arith.constant 0.000000e+00 : f32
    %10 = vector.broadcast %cst_7 : f32 to vector<128x128xf32>
    %11 = arith.maximumf %9, %10 : vector<128x128xf32>
    %cst_8 = arith.constant dense<0.000000e+00> : vector<2x128xf32>
    %12 = tpu.matmul %5, %11, %cst_8 {dimension_numbers = #tpu.dot_dimension_numbers<[1], [0], [0], [1], [0, 0, 1, 1], [], []>} : vector<2x128xf32>, vector<128x128xf32>, vector<2x128xf32> -> vector<2x128xf32>
    %c0_9 = arith.constant 0 : index
    %c0_10 = arith.constant 0 : index
    %13 = vector.load %arg5[%c0_9, %c0_10] : memref<2x1xf32, #tpu.memory_space<vmem>>, vector<2x1xf32>
    %14 = vector.broadcast %13 : vector<2x1xf32> to vector<2x128xf32>
    %15 = arith.addf %12, %14 : vector<2x128xf32>
    %c0_11 = arith.constant 0 : index
    %c0_12 = arith.constant 0 : index
    %16 = vector.load %arg6[%c0_11, %c0_12] : memref<2x128xf32, #tpu.memory_space<vmem>>, vector<2x128xf32>
    tpu.vector_store %arg6[%c0_11, %c0_12], %15 {strides = array<i32>} : memref<2x128xf32, #tpu.memory_space<vmem>>, vector<2x128xf32>,
    return
  }
  func.func @transform_0(%arg0: i32) -> (i32, i32) {
    %c0_i32 = arith.constant 0 : i32
    %c0_i32_0 = arith.constant 0 : i32
    return %c0_i32, %arg0 : i32, i32
  }
  func.func @transform_1(%arg0: i32) -> (i32, i32) {
    %c0_i32 = arith.constant 0 : i32
    %c0_i32_0 = arith.constant 0 : i32
    %c0_i32_1 = arith.constant 0 : i32
    return %c0_i32, %c0_i32_0 : i32, i32
  }
  func.func @transform_2(%arg0: i32) -> (i32, i32) {
    %c0_i32 = arith.constant 0 : i32
    %c0_i32_0 = arith.constant 0 : i32
    %c0_i32_1 = arith.constant 0 : i32
    return %c0_i32, %c0_i32_0 : i32, i32
  }
  func.func @transform_3(%arg0: i32) -> (i32, i32) {
    %c0_i32 = arith.constant 0 : i32
    %c0_i32_0 = arith.constant 0 : i32
    %c0_i32_1 = arith.constant 0 : i32
    return %c0_i32, %c0_i32_0 : i32, i32
  }
  func.func @transform_4(%arg0: i32) -> (i32, i32) {
    %c0_i32 = arith.constant 0 : i32
    %c0_i32_0 = arith.constant 0 : i32
    %c0_i32_1 = arith.constant 0 : i32
    return %c0_i32, %c0_i32_0 : i32, i32
  }
  func.func @transform_5(%arg0: i32) -> (i32, i32) {
    %c0_i32 = arith.constant 0 : i32
    %c0_i32_0 = arith.constant 0 : i32
    return %c0_i32, %arg0 : i32, i32
  }
}

</mosaic_0001>

<llo_original>
// kernel: qnetwork_forward.1
$region0: #{qnetwork_forward.1}
  #allocation0 [shape = 'u32[]', space=smem, size = 0x4, offset = 0x4, fixed_abs, tag = 'smem constant byte address 0x4 - core index']
  #allocation1 [shape = 'u32[144,128]{1,0:T(1,128)}', space=vmem, size = 0x12000, scoped, tag = 'internal scratch']
  %s0 = inlined_call_operand.vmem [shape: bf16[8,128], index: 0, kind: input, shape index: {}]
  %s1 = inlined_call_operand.vmem [shape: bf16[128,8], index: 1, kind: input, shape index: {}]
  %s2 = inlined_call_operand.vmem [shape: f32[128,1], index: 2, kind: input, shape index: {}]
  %s3 = inlined_call_operand.vmem [shape: bf16[2,128], index: 3, kind: input, shape index: {}]
  %s4 = inlined_call_operand.vmem [shape: f32[2,1], index: 4, kind: input, shape index: {}]
  %s5 = inlined_call_operand.vmem [shape: f32[2,128], index: 5, kind: output, shape index: {}]
  %s6 = sld [smem:[#allocation0]]
  $region30: #{qnetwork_forward.1} parent=0
    _
  %s8 = ssub.s32 1, %s6
  %s9 = scalar_select 0, %s8, %s6
  // Predicated region
  $region2: #{qnetwork_forward.1} parent=0 // pred_check
    _
  $region3: #{qnetwork_forward.1} parent=0 // pred_check_branch
    %11 = sbr.rel (0) target = $region5
  $region4: #{qnetwork_forward.1} parent=0 // pred_region
    _
  $region5: #{qnetwork_forward.1} parent=0 // pred_fallthru
    _
  // Predicated region
  $region6: #{qnetwork_forward.1} parent=0 // pred_check
    _
  $region7: #{qnetwork_forward.1} parent=0 // pred_check_branch
    %13 = sbr.rel (0) target = $region9
  $region8: #{qnetwork_forward.1} parent=0 // pred_region
    _
  $region9: #{qnetwork_forward.1} parent=0 // pred_fallthru
    _
  // Predicated region
  $region10: #{qnetwork_forward.1} parent=0 // pred_check
    _
  $region11: #{qnetwork_forward.1} parent=0 // pred_check_branch
    %15 = sbr.rel (0) target = $region13
  $region12: #{qnetwork_forward.1} parent=0 // pred_region
    _
  $region13: #{qnetwork_forward.1} parent=0 // pred_fallthru
    _
  // Predicated region
  $region14: #{qnetwork_forward.1} parent=0 // pred_check
    _
  $region15: #{qnetwork_forward.1} parent=0 // pred_check_branch
    %17 = sbr.rel (0) target = $region17
  $region16: #{qnetwork_forward.1} parent=0 // pred_region
    _
  $region17: #{qnetwork_forward.1} parent=0 // pred_fallthru
    _
  // Predicated region
  $region18: #{qnetwork_forward.1} parent=0 // pred_check
    _
  $region19: #{qnetwork_forward.1} parent=0 // pred_check_branch
    %19 = sbr.rel (0) target = $region21
  $region20: #{qnetwork_forward.1} parent=0 // pred_region
    _
  $region21: #{qnetwork_forward.1} parent=0 // pred_fallthru
    _
  %v20 = vld [vmem:[%s0] sm:$0xf]
  %v21 = vunpack.c.l.bf16 %v20
  %v22 = vld [vmem:[%s1] sm:$0xf]
  %v23 = vld [vmem:[%s1 + $0x4] sm:$0xf]
  %v24 = vld [vmem:[%s1 + $0x8] sm:$0xf]
  %v25 = vld [vmem:[%s1 + $0xc] sm:$0xf]
  %v26 = vld [vmem:[%s1 + $0x10] sm:$0xf]
  %v27 = vld [vmem:[%s1 + $0x14] sm:$0xf]
  %v28 = vld [vmem:[%s1 + $0x18] sm:$0xf]
  %v29 = vld [vmem:[%s1 + $0x1c] sm:$0xf]
  %v30 = vld [vmem:[%s1 + $0x20] sm:$0xf]
  %v31 = vld [vmem:[%s1 + $0x24] sm:$0xf]
  %v32 = vld [vmem:[%s1 + $0x28] sm:$0xf]
  %v33 = vld [vmem:[%s1 + $0x2c] sm:$0xf]
  %v34 = vld [vmem:[%s1 + $0x30] sm:$0xf]
  %v35 = vld [vmem:[%s1 + $0x34] sm:$0xf]
  %v36 = vld [vmem:[%s1 + $0x38] sm:$0xf]
  %v37 = vld [vmem:[%s1 + $0x3c] sm:$0xf]
  %v38 = vunpack.c.l.bf16 %v22
  %v39 = vunpack.c.l.bf16 %v23
  %v40 = vunpack.c.l.bf16 %v24
  %v41 = vunpack.c.l.bf16 %v25
  %v42 = vunpack.c.l.bf16 %v26
  %v43 = vunpack.c.l.bf16 %v27
  %v44 = vunpack.c.l.bf16 %v28
  %v45 = vunpack.c.l.bf16 %v29
  %v46 = vunpack.c.l.bf16 %v30
  %v47 = vunpack.c.l.bf16 %v31
  %v48 = vunpack.c.l.bf16 %v32
  %v49 = vunpack.c.l.bf16 %v33
  %v50 = vunpack.c.l.bf16 %v34
  %v51 = vunpack.c.l.bf16 %v35
  %v52 = vunpack.c.l.bf16 %v36
  %v53 = vunpack.c.l.bf16 %v37
  %v54 = vld [vmem:[%s3] sm:$0x1]
  %v55 = vunpack.c.l.bf16 %v54
  %v56 = vld [vmem:[%s2] sm:$0xff]
  %v57 = vld [vmem:[%s2 + $0x8] sm:$0xff]
  %v58 = vld [vmem:[%s2 + $0x10] sm:$0xff]
  %v59 = vld [vmem:[%s2 + $0x18] sm:$0xff]
  %v60 = vld [vmem:[%s2 + $0x20] sm:$0xff]
  %v61 = vld [vmem:[%s2 + $0x28] sm:$0xff]
  %v62 = vld [vmem:[%s2 + $0x30] sm:$0xff]
  %v63 = vld [vmem:[%s2 + $0x38] sm:$0xff]
  %v64 = vld [vmem:[%s2 + $0x40] sm:$0xff]
  %v65 = vld [vmem:[%s2 + $0x48] sm:$0xff]
  %v66 = vld [vmem:[%s2 + $0x50] sm:$0xff]
  %v67 = vld [vmem:[%s2 + $0x58] sm:$0xff]
  %v68 = vld [vmem:[%s2 + $0x60] sm:$0xff]
  %v69 = vld [vmem:[%s2 + $0x68] sm:$0xff]
  %v70 = vld [vmem:[%s2 + $0x70] sm:$0xff]
  %v71 = vld [vmem:[%s2 + $0x78] sm:$0xff]
  %73 = vset.pattern.permute.xlu0 0
  %74 = vperm.xlu0 %73, %v56
  %v75 = vpop.permute.xlu0 %74
  %78 = vset.pattern.permute.xlu0 0
  %79 = vperm.xlu0 %78, %v57
  %v80 = vpop.permute.xlu0 %79
  %83 = vset.pattern.permute.xlu0 0
  %84 = vperm.xlu0 %83, %v58
  %v85 = vpop.permute.xlu0 %84
  %88 = vset.pattern.permute.xlu0 0
  %89 = vperm.xlu0 %88, %v59
  %v90 = vpop.permute.xlu0 %89
  %93 = vset.pattern.permute.xlu0 0
  %94 = vperm.xlu0 %93, %v60
  %v95 = vpop.permute.xlu0 %94
  %98 = vset.pattern.permute.xlu0 0
  %99 = vperm.xlu0 %98, %v61
  %v100 = vpop.permute.xlu0 %99
  %103 = vset.pattern.permute.xlu0 0
  %104 = vperm.xlu0 %103, %v62
  %v105 = vpop.permute.xlu0 %104
  %108 = vset.pattern.permute.xlu0 0
  %109 = vperm.xlu0 %108, %v63
  %v110 = vpop.permute.xlu0 %109
  %113 = vset.pattern.permute.xlu0 0
  %114 = vperm.xlu0 %113, %v64
  %v115 = vpop.permute.xlu0 %114
  %118 = vset.pattern.permute.xlu0 0
  %119 = vperm.xlu0 %118, %v65
  %v120 = vpop.permute.xlu0 %119
  %123 = vset.pattern.permute.xlu0 0
  %124 = vperm.xlu0 %123, %v66
  %v125 = vpop.permute.xlu0 %124
  %128 = vset.pattern.permute.xlu0 0
  %129 = vperm.xlu0 %128, %v67
  %v130 = vpop.permute.xlu0 %129
  %133 = vset.pattern.permute.xlu0 0
  %134 = vperm.xlu0 %133, %v68
  %v135 = vpop.permute.xlu0 %134
  %138 = vset.pattern.permute.xlu0 0
  %139 = vperm.xlu0 %138, %v69
  %v140 = vpop.permute.xlu0 %139
  %143 = vset.pattern.permute.xlu0 0
  %144 = vperm.xlu0 %143, %v70
  %v145 = vpop.permute.xlu0 %144
  %148 = vset.pattern.permute.xlu0 0
  %149 = vperm.xlu0 %148, %v71
  %v150 = vpop.permute.xlu0 %149
  %vm152 = vcmask 64512
  %v154 = vsel %vm152, %v38, 0
  %v157 = vsel %vm152, %v39, 0
  %v160 = vsel %vm152, %v40, 0
  %v163 = vsel %vm152, %v41, 0
  %v166 = vsel %vm152, %v42, 0
  %v169 = vsel %vm152, %v43, 0
  %v172 = vsel %vm152, %v44, 0
  %v175 = vsel %vm152, %v45, 0
  %v178 = vsel %vm152, %v46, 0
  %v181 = vsel %vm152, %v47, 0
  %v184 = vsel %vm152, %v48, 0
  %v187 = vsel %vm152, %v49, 0
  %v190 = vsel %vm152, %v50, 0
  %v193 = vsel %vm152, %v51, 0
  %v196 = vsel %vm152, %v52, 0
  %v199 = vsel %vm152, %v53, 0
  %201 = vmatprep.subr.mxu0 0.0
  %202 = vmatpush1.msra.mxu0 %v21
  %203 = vmatprep.subr.mxu0 0.0
  %204 = vmatpush1.msra.mxu0 0.0
  %205 = vmatprep.subr.mxu0 0.0
  %206 = vmatpush1.msra.mxu0 0.0
  %207 = vmatprep.subr.mxu0 0.0
  %208 = vmatpush1.msra.mxu0 0.0
  %209 = vmatprep.subr.mxu0 0.0
  %210 = vmatpush1.msra.mxu0 0.0
  %211 = vmatprep.subr.mxu0 0.0
  %212 = vmatpush1.msra.mxu0 0.0
  %213 = vmatprep.subr.mxu0 0.0
  %214 = vmatpush1.msra.mxu0 0.0
  %215 = vmatprep.subr.mxu0 0.0
  %216 = vmatpush1.msra.mxu0 0.0
  %217 = vmatprep.subr.mxu0 0.0
  %218 = vmatpush1.msra.mxu0 0.0
  %219 = vmatprep.subr.mxu0 0.0
  %220 = vmatpush1.msra.mxu0 0.0
  %221 = vmatprep.subr.mxu0 0.0
  %222 = vmatpush1.msra.mxu0 0.0
  %223 = vmatprep.subr.mxu0 0.0
  %224 = vmatpush1.msra.mxu0 0.0
  %225 = vmatprep.subr.mxu0 0.0
  %226 = vmatpush1.msra.mxu0 0.0
  %227 = vmatprep.subr.mxu0 0.0
  %228 = vmatpush1.msra.mxu0 0.0
  %229 = vmatprep.subr.mxu0 0.0
  %230 = vmatpush1.msra.mxu0 0.0
  %231 = vmatprep.subr.mxu0 0.0
  %232 = vmatpush1.msra.mxu0 0.0
  %233 = vmatprep.subr.mxu0 0.0
  %234 = vmatpush1.msra.mxu0 0.0
  %235 = vmatprep.subr.mxu0 0.0
  %236 = vmatpush1.msra.mxu0 0.0
  %237 = vmatprep.subr.mxu0 0.0
  %238 = vmatpush1.msra.mxu0 0.0
  %239 = vmatprep.subr.mxu0 0.0
  %240 = vmatpush1.msra.mxu0 0.0
  %241 = vmatprep.subr.mxu0 0.0
  %242 = vmatpush1.msra.mxu0 0.0
  %243 = vmatprep.subr.mxu0 0.0
  %244 = vmatpush1.msra.mxu0 0.0
  %245 = vmatprep.subr.mxu0 0.0
  %246 = vmatpush1.msra.mxu0 0.0
  %247 = vmatprep.subr.mxu0 0.0
  %248 = vmatpush1.msra.mxu0 0.0
  %249 = vmatprep.subr.mxu0 0.0
  %250 = vmatpush1.msra.mxu0 0.0
  %251 = vmatprep.subr.mxu0 0.0
  %252 = vmatpush1.msra.mxu0 0.0
  %253 = vmatprep.subr.mxu0 0.0
  %254 = vmatpush1.msra.mxu0 0.0
  %255 = vmatprep.subr.mxu0 0.0
  %256 = vmatpush1.msra.mxu0 0.0
  %257 = vmatprep.subr.mxu0 0.0
  %258 = vmatpush1.msra.mxu0 0.0
  %259 = vmatprep.subr.mxu0 0.0
  %260 = vmatpush1.msra.mxu0 0.0
  %261 = vmatprep.subr.mxu0 0.0
  %262 = vmatpush1.msra.mxu0 0.0
  %263 = vmatprep.subr.mxu0 0.0
  %264 = vmatpush1.msra.mxu0 0.0
  %265 = vmatprep.mubr.f32.mxu0 0.0
  %266 = vmatmul.mubr.f32.gmra.mrb[0].mxu0 %v154
  %v267 = vpop.f32.mrb[0].mxu0
  %v268 = vadd.f32 %v75, %v267
  %v269 = vpop.f32.mrb[0].mxu0
  %270 = vmatprep.mubr.f32.mxu0 0.0
  %271 = vmatmul.mubr.f32.gmra.mrb[0].mxu0 %v157
  %v272 = vpop.f32.mrb[0].mxu0
  %v273 = vadd.f32 %v80, %v272
  %v274 = vpop.f32.mrb[0].mxu0
  %275 = vmatprep.mubr.f32.mxu0 0.0
  %276 = vmatmul.mubr.f32.gmra.mrb[0].mxu0 %v160
  %v277 = vpop.f32.mrb[0].mxu0
  %v278 = vadd.f32 %v85, %v277
  %v279 = vpop.f32.mrb[0].mxu0
  %280 = vmatprep.mubr.f32.mxu0 0.0
  %281 = vmatmul.mubr.f32.gmra.mrb[0].mxu0 %v163
  %v282 = vpop.f32.mrb[0].mxu0
  %v283 = vadd.f32 %v90, %v282
  %v284 = vpop.f32.mrb[0].mxu0
  %285 = vmatprep.mubr.f32.mxu0 0.0
  %286 = vmatmul.mubr.f32.gmra.mrb[0].mxu0 %v166
  %v287 = vpop.f32.mrb[0].mxu0
  %v288 = vadd.f32 %v95, %v287
  %v289 = vpop.f32.mrb[0].mxu0
  %290 = vmatprep.mubr.f32.mxu0 0.0
  %291 = vmatmul.mubr.f32.gmra.mrb[0].mxu0 %v169
  %v292 = vpop.f32.mrb[0].mxu0
  %v293 = vadd.f32 %v100, %v292
  %v294 = vpop.f32.mrb[0].mxu0
  %295 = vmatprep.mubr.f32.mxu0 0.0
  %296 = vmatmul.mubr.f32.gmra.mrb[0].mxu0 %v172
  %v297 = vpop.f32.mrb[0].mxu0
  %v298 = vadd.f32 %v105, %v297
  %v299 = vpop.f32.mrb[0].mxu0
  %300 = vmatprep.mubr.f32.mxu0 0.0
  %301 = vmatmul.mubr.f32.gmra.mrb[0].mxu0 %v175
  %v302 = vpop.f32.mrb[0].mxu0
  %v303 = vadd.f32 %v110, %v302
  %v304 = vpop.f32.mrb[0].mxu0
  %305 = vmatprep.mubr.f32.mxu0 0.0
  %306 = vmatmul.mubr.f32.gmra.mrb[0].mxu0 %v178
  %v307 = vpop.f32.mrb[0].mxu0
  %v308 = vadd.f32 %v115, %v307
  %v309 = vpop.f32.mrb[0].mxu0
  %310 = vmatprep.mubr.f32.mxu0 0.0
  %311 = vmatmul.mubr.f32.gmra.mrb[0].mxu0 %v181
  %v312 = vpop.f32.mrb[0].mxu0
  %v313 = vadd.f32 %v120, %v312
  %v314 = vpop.f32.mrb[0].mxu0
  %315 = vmatprep.mubr.f32.mxu0 0.0
  %316 = vmatmul.mubr.f32.gmra.mrb[0].mxu0 %v184
  %v317 = vpop.f32.mrb[0].mxu0
  %v318 = vadd.f32 %v125, %v317
  %v319 = vpop.f32.mrb[0].mxu0
  %320 = vmatprep.mubr.f32.mxu0 0.0
  %321 = vmatmul.mubr.f32.gmra.mrb[0].mxu0 %v187
  %v322 = vpop.f32.mrb[0].mxu0
  %v323 = vadd.f32 %v130, %v322
  %v324 = vpop.f32.mrb[0].mxu0
  %325 = vmatprep.mubr.f32.mxu0 0.0
  %326 = vmatmul.mubr.f32.gmra.mrb[0].mxu0 %v190
  %v327 = vpop.f32.mrb[0].mxu0
  %v328 = vadd.f32 %v135, %v327
  %v329 = vpop.f32.mrb[0].mxu0
  %330 = vmatprep.mubr.f32.mxu0 0.0
  %331 = vmatmul.mubr.f32.gmra.mrb[0].mxu0 %v193
  %v332 = vpop.f32.mrb[0].mxu0
  %v333 = vadd.f32 %v140, %v332
  %v334 = vpop.f32.mrb[0].mxu0
  %335 = vmatprep.mubr.f32.mxu0 0.0
  %336 = vmatmul.mubr.f32.gmra.mrb[0].mxu0 %v196
  %v337 = vpop.f32.mrb[0].mxu0
  %v338 = vadd.f32 %v145, %v337
  %v339 = vpop.f32.mrb[0].mxu0
  %340 = vmatprep.mubr.f32.mxu0 0.0
  %341 = vmatmul.mubr.f32.gmra.mrb[0].mxu0 %v199
  %v342 = vpop.f32.mrb[0].mxu0
  %v343 = vadd.f32 %v150, %v342
  %v344 = vpop.f32.mrb[0].mxu0
  %345 = vdwg.mxu0
  %v346 = vmax.f32 %v268, 0.0
  %v347 = vmax.f32 %v273, 0.0
  %v348 = vmax.f32 %v278, 0.0
  %v349 = vmax.f32 %v283, 0.0
  %v350 = vmax.f32 %v288, 0.0
  %v351 = vmax.f32 %v293, 0.0
  %v352 = vmax.f32 %v298, 0.0
  %v353 = vmax.f32 %v303, 0.0
  %v354 = vmax.f32 %v308, 0.0
  %v355 = vmax.f32 %v313, 0.0
  %v356 = vmax.f32 %v318, 0.0
  %v357 = vmax.f32 %v323, 0.0
  %v358 = vmax.f32 %v328, 0.0
  %v359 = vmax.f32 %v333, 0.0
  %v360 = vmax.f32 %v338, 0.0
  %v361 = vmax.f32 %v343, 0.0
  %v362 = vld [vmem:[%s4] sm:$0x3]
  %364 = vset.pattern.permute.xlu0 0
  %365 = vperm.xlu0 %364, %v362
  %v366 = vpop.permute.xlu0 %365
  %368 = vmatprep.subr.mxu0 0.0
  %369 = vmatpush1.msra.mxu0 %v346
  %370 = vmatprep.subr.mxu0 0.0
  %371 = vmatpush1.msra.mxu0 %v347
  %372 = vmatprep.subr.mxu0 0.0
  %373 = vmatpush1.msra.mxu0 %v348
  %374 = vmatprep.subr.mxu0 0.0
  %375 = vmatpush1.msra.mxu0 %v349
  %376 = vmatprep.subr.mxu0 0.0
  %377 = vmatpush1.msra.mxu0 %v350
  %378 = vmatprep.subr.mxu0 0.0
  %379 = vmatpush1.msra.mxu0 %v351
  %380 = vmatprep.subr.mxu0 0.0
  %381 = vmatpush1.msra.mxu0 %v352
  %382 = vmatprep.subr.mxu0 0.0
  %383 = vmatpush1.msra.mxu0 %v353
  %384 = vmatprep.subr.mxu0 0.0
  %385 = vmatpush1.msra.mxu0 %v354
  %386 = vmatprep.subr.mxu0 0.0
  %387 = vmatpush1.msra.mxu0 %v355
  %388 = vmatprep.subr.mxu0 0.0
  %389 = vmatpush1.msra.mxu0 %v356
  %390 = vmatprep.subr.mxu0 0.0
  %391 = vmatpush1.msra.mxu0 %v357
  %392 = vmatprep.subr.mxu0 0.0
  %393 = vmatpush1.msra.mxu0 %v358
  %394 = vmatprep.subr.mxu0 0.0
  %395 = vmatpush1.msra.mxu0 %v359
  %396 = vmatprep.subr.mxu0 0.0
  %397 = vmatpush1.msra.mxu0 %v360
  %398 = vmatprep.subr.mxu0 0.0
  %399 = vmatpush1.msra.mxu0 %v361
  %400 = vmatprep.subr.mxu0 0.0
  %401 = vmatpush1.msra.mxu0 0.0
  %402 = vmatprep.subr.mxu0 0.0
  %403 = vmatpush1.msra.mxu0 0.0
  %404 = vmatprep.subr.mxu0 0.0
  %405 = vmatpush1.msra.mxu0 0.0
  %406 = vmatprep.subr.mxu0 0.0
  %407 = vmatpush1.msra.mxu0 0.0
  %408 = vmatprep.subr.mxu0 0.0
  %409 = vmatpush1.msra.mxu0 0.0
  %410 = vmatprep.subr.mxu0 0.0
  %411 = vmatpush1.msra.mxu0 0.0
  %412 = vmatprep.subr.mxu0 0.0
  %413 = vmatpush1.msra.mxu0 0.0
  %414 = vmatprep.subr.mxu0 0.0
  %415 = vmatpush1.msra.mxu0 0.0
  %416 = vmatprep.subr.mxu0 0.0
  %417 = vmatpush1.msra.mxu0 0.0
  %418 = vmatprep.subr.mxu0 0.0
  %419 = vmatpush1.msra.mxu0 0.0
  %420 = vmatprep.subr.mxu0 0.0
  %421 = vmatpush1.msra.mxu0 0.0
  %422 = vmatprep.subr.mxu0 0.0
  %423 = vmatpush1.msra.mxu0 0.0
  %424 = vmatprep.subr.mxu0 0.0
  %425 = vmatpush1.msra.mxu0 0.0
  %426 = vmatprep.subr.mxu0 0.0
  %427 = vmatpush1.msra.mxu0 0.0
  %428 = vmatprep.subr.mxu0 0.0
  %429 = vmatpush1.msra.mxu0 0.0
  %430 = vmatprep.subr.mxu0 0.0
  %431 = vmatpush1.msra.mxu0 0.0
  %432 = vmatprep.mubr.f32.mxu0 0.0
  %433 = vmatmul.mubr.f32.gmra.mrb[0].mxu0 %v55
  %v434 = vpop.f32.mrb[0].mxu0
  %v435 = vadd.f32 %v366, %v434
  %v436 = vpop.f32.mrb[0].mxu0
  %437 = vdwg.mxu0
  %438 = vst [vmem:[%s5] sm:$0x3] %v435
  // Predicated region
  $region22: #{qnetwork_forward.1} parent=0 // pred_check
    _
  $region23: #{qnetwork_forward.1} parent=0 // pred_check_branch
    %440 = sbr.rel (0) target = $region25
  $region24: #{qnetwork_forward.1} parent=0 // pred_region
    _
  $region25: #{qnetwork_forward.1} parent=0 // pred_fallthru
    _
  // Predicated region
  $region26: #{qnetwork_forward.1} parent=0 // pred_check
    _
  $region27: #{qnetwork_forward.1} parent=0 // pred_check_branch
    %442 = sbr.rel (0) target = $region29
  $region28: #{qnetwork_forward.1} parent=0 // pred_region
    _
  $region29: #{qnetwork_forward.1} parent=0 // pred_fallthru
    _

</llo_original>
